<compile_context>
chip_gen: v7x
topology: tpu7x:2x2x1
jax: 0.10.0
libtpu: 0.0.40
codegen_flags: <defaults>
</compile_context>

<pallas_src>
import math
from functools import partial
from collections import namedtuple

import jax
import jax.numpy as jnp
from jax.experimental import pallas as pl
from jax.experimental.pallas import tpu as pltpu


# ------------------------------------------------------------------ config ---
class Config:
    vocab_size = 128
    hidden = 32
    num_layers = 2
    num_heads = 2
    head_dim = 16          # hidden // num_heads
    intermediate = 64
    max_position = 16
    type_vocab = 2
    ln_eps = 1e-12


CFG = Config()

MLMOutput = namedtuple("MLMOutput", ["loss", "logits", "hidden_states", "attentions"])


# ----------------------------------------------- in-kernel helper functions ---
def _layernorm(x, g, b, eps):
    """LayerNorm over the last axis, f32 statistics."""
    mu = jnp.mean(x, axis=-1, keepdims=True)
    xc = x - mu
    var = jnp.mean(xc * xc, axis=-1, keepdims=True)
    return xc * jax.lax.rsqrt(var + eps) * g + b


def _gelu(x):
    """Exact (erf) GELU, as used by HF BERT ('gelu')."""
    return 0.5 * x * (1.0 + jax.lax.erf(x * (1.0 / math.sqrt(2.0))))


# -------------------------------------- kernel 1: embedding LayerNorm (LN only) ---
def _ln_kernel(x_ref, g_ref, b_ref, o_ref, *, eps):
    x = x_ref[...].astype(jnp.float32)
    o_ref[...] = _layernorm(x, g_ref[...], b_ref[...], eps).astype(o_ref.dtype)


def embedding_layernorm(x2d, gamma2d, beta2d, eps):
    M, H = x2d.shape
    return pl.pallas_call(
        partial(_ln_kernel, eps=eps),
        grid=(1,),
        in_specs=[pl.BlockSpec((M, H), lambda i: (0, 0)),
                  pl.BlockSpec((1, H), lambda i: (0, 0)),
                  pl.BlockSpec((1, H), lambda i: (0, 0))],
        out_specs=pl.BlockSpec((M, H), lambda i: (0, 0)),
        out_shape=jax.ShapeDtypeStruct((M, H), jnp.float32),
    )(x2d, gamma2d, beta2d)


# ------------------------------- kernel 2: fully fused transformer encoder layer ---
def _encoder_layer_kernel(x_ref, wqkv_ref, bqkv_ref, wo_ref, bo_ref,
                          ln1_g_ref, ln1_b_ref, wi_ref, bi_ref,
                          wf_ref, bf_ref, ln2_g_ref, ln2_b_ref,
                          out_ref, probs_ref, ctx_scr,
                          *, num_heads, head_dim, eps):
    """One encoder layer for one batch element; everything stays in VMEM.

    x_ref: [S, H] activations; probs_ref: [nH, S, S]; ctx_scr: VMEM [S, H] f32.
    """
    x = x_ref[...].astype(jnp.float32)          # residual stream in f32
    H = x.shape[-1]
    scale = 1.0 / math.sqrt(head_dim)

    # Fused Q|K|V projection: single MXU push, lane width 3H.
    qkv = jnp.dot(x.astype(jnp.bfloat16), wqkv_ref[...],
                  preferred_element_type=jnp.float32) + bqkv_ref[...]   # [S, 3H] f32

    # Per-head attention; context assembled in VMEM scratch (no HBM round trip).
    for h in range(num_heads):
        q = qkv[:, h * head_dim:(h + 1) * head_dim].astype(jnp.bfloat16)
        k = qkv[:, H + h * head_dim: H + (h + 1) * head_dim].astype(jnp.bfloat16)
        v = qkv[:, 2 * H + h * head_dim: 2 * H + (h + 1) * head_dim].astype(jnp.bfloat16)
        # q @ k^T without an explicit transpose (MXU consumes either orientation).
        s = jax.lax.dot_general(q, k, (((1,), (1,)), ((), ())),
                                preferred_element_type=jnp.float32) * scale   # [S, S]
        m = jnp.max(s, axis=-1, keepdims=True)
        e = jnp.exp(s - m)
        p = e * pl.reciprocal(jnp.sum(e, axis=-1, keepdims=True), approx=True)
        probs_ref[h, :, :] = p
        ctx_scr[:, h * head_dim:(h + 1) * head_dim] = jnp.dot(
            p.astype(jnp.bfloat16), v, preferred_element_type=jnp.float32)

    ctx = ctx_scr[...]
    attn_out = jnp.dot(ctx.astype(jnp.bfloat16), wo_ref[...],
                       preferred_element_type=jnp.float32) + bo_ref[...]
    h1 = _layernorm(attn_out + x, ln1_g_ref[...], ln1_b_ref[...], eps)

    inter = _gelu(jnp.dot(h1.astype(jnp.bfloat16), wi_ref[...],
                          preferred_element_type=jnp.float32) + bi_ref[...])
    ffo = jnp.dot(inter.astype(jnp.bfloat16), wf_ref[...],
                  preferred_element_type=jnp.float32) + bf_ref[...]
    out = _layernorm(ffo + h1, ln2_g_ref[...], ln2_b_ref[...], eps)

    out_ref[...] = out.astype(out_ref.dtype)


def encoder_layer(x2d, lp, B, S, cfg):
    """x2d: [B*S, H] f32 -> (new activations [B*S, H] f32, probs [B, nH, S, S] f32)."""
    H, nH, Dh, I = cfg.hidden, cfg.num_heads, cfg.head_dim, cfg.intermediate
    const = lambda b: (0, 0)          # weights: same block every grid step (VMEM-resident)
    out, probs = pl.pallas_call(
        partial(_encoder_layer_kernel, num_heads=nH, head_dim=Dh, eps=cfg.ln_eps),
        grid=(B,),
        in_specs=[
            pl.BlockSpec((S, H), lambda b: (b, 0)),      # activations of batch b
            pl.BlockSpec((H, 3 * H), const),             # fused QKV weight (bf16)
            pl.BlockSpec((1, 3 * H), const),             # fused QKV bias   (f32)
            pl.BlockSpec((H, H), const),                 # wo
            pl.BlockSpec((1, H), const),                 # bo
            pl.BlockSpec((1, H), const),                 # ln1 gamma
            pl.BlockSpec((1, H), const),                 # ln1 beta
            pl.BlockSpec((H, I), const),                 # wi
            pl.BlockSpec((1, I), const),                 # bi
            pl.BlockSpec((I, H), const),                 # wf
            pl.BlockSpec((1, H), const),                 # bf
            pl.BlockSpec((1, H), const),                 # ln2 gamma
            pl.BlockSpec((1, H), const),                 # ln2 beta
        ],
        out_specs=[
            pl.BlockSpec((S, H), lambda b: (b, 0)),
            pl.BlockSpec((pl.Squeezed(), nH, S, S), lambda b: (b, 0, 0, 0)),
        ],
        out_shape=[
            jax.ShapeDtypeStruct((B * S, H), jnp.float32),
            jax.ShapeDtypeStruct((B, nH, S, S), jnp.float32),
        ],
        scratch_shapes=[pltpu.VMEM((S, H), jnp.float32)],
        compiler_params=pltpu.CompilerParams(dimension_semantics=("parallel",)),
    )(x2d, lp["wqkv"], lp["bqkv"], lp["wo"], lp["bo"],
      lp["ln1_g"], lp["ln1_b"], lp["wi"], lp["bi"],
      lp["wf"], lp["bf"], lp["ln2_g"], lp["ln2_b"])
    return out, probs


# ------------------------- kernel 3: fused MLM head (dense+GELU+LN+tied decoder) ---
def _mlm_head_kernel(x_ref, w_ref, b_ref, g_ref, be_ref, emb_ref, dbias_ref, o_ref,
                     *, eps):
    x = x_ref[...]
    t = jnp.dot(x.astype(jnp.bfloat16), w_ref[...],
                preferred_element_type=jnp.float32) + b_ref[...]
    t = _gelu(t)
    t = _layernorm(t, g_ref[...], be_ref[...], eps)
    # Tied decoder: t @ E^T done on the MXU (no materialized transpose in HBM).
    logits = jax.lax.dot_general(t.astype(jnp.bfloat16), emb_ref[...],
                                 (((1,), (1,)), ((), ())),
                                 preferred_element_type=jnp.float32) + dbias_ref[...]
    o_ref[...] = logits                                      # [M, V], V=128 lane-dense


def mlm_head(x2d, params, cfg):
    M, H = x2d.shape
    V = cfg.vocab_size
    return pl.pallas_call(
        partial(_mlm_head_kernel, eps=cfg.ln_eps),
        grid=(1,),
        in_specs=[
            pl.BlockSpec((M, H), lambda i: (0, 0)),
            pl.BlockSpec((H, H), lambda i: (0, 0)),
            pl.BlockSpec((1, H), lambda i: (0, 0)),
            pl.BlockSpec((1, H), lambda i: (0, 0)),
            pl.BlockSpec((1, H), lambda i: (0, 0)),
            pl.BlockSpec((V, H), lambda i: (0, 0)),
            pl.BlockSpec((1, V), lambda i: (0, 0)),
        ],
        out_specs=pl.BlockSpec((M, V), lambda i: (0, 0)),
        out_shape=jax.ShapeDtypeStruct((M, V), jnp.float32),
    )(x2d, params["mlm_dense_w"], params["mlm_dense_b"],
      params["mlm_ln_g"], params["mlm_ln_b"],
      params["word_emb"], params["decoder_bias"])


# ------------------------------------------------------------- parameters ---
def init_params(key, cfg=CFG):
    def nrm(k, shape, dtype=jnp.bfloat16):
        return (0.02 * jax.random.normal(k, shape, jnp.float32)).astype(dtype)

    keys = iter(jax.random.split(key, 64))
    H, I, V = cfg.hidden, cfg.intermediate, cfg.vocab_size
    p = {
        "word_emb": nrm(next(keys), (V, H)),                       # bf16, tied decoder
        "pos_emb": nrm(next(keys), (cfg.max_position, H), jnp.float32),
        "type_emb": nrm(next(keys), (cfg.type_vocab, H), jnp.float32),
        "emb_ln_g": jnp.ones((1, H), jnp.float32),
        "emb_ln_b": jnp.zeros((1, H), jnp.float32),
        "layers": [],
        # MLM head (transform + decoder tied to word embeddings)
        "mlm_dense_w": nrm(next(keys), (H, H)),
        "mlm_dense_b": jnp.zeros((1, H), jnp.float32),
        "mlm_ln_g": jnp.ones((1, H), jnp.float32),
        "mlm_ln_b": jnp.zeros((1, H), jnp.float32),
        "decoder_bias": jnp.zeros((1, V), jnp.float32),
    }
    for _ in range(cfg.num_layers):
        p["layers"].append({
            "wqkv": nrm(next(keys), (H, 3 * H)),                   # fused Q|K|V (bf16)
            "bqkv": jnp.zeros((1, 3 * H), jnp.float32),
            "wo": nrm(next(keys), (H, H)), "bo": jnp.zeros((1, H), jnp.float32),
            "ln1_g": jnp.ones((1, H), jnp.float32), "ln1_b": jnp.zeros((1, H), jnp.float32),
            "wi": nrm(next(keys), (H, I)), "bi": jnp.zeros((1, I), jnp.float32),
            "wf": nrm(next(keys), (I, H)), "bf": jnp.zeros((1, H), jnp.float32),
            "ln2_g": jnp.ones((1, H), jnp.float32), "ln2_b": jnp.zeros((1, H), jnp.float32),
        })
    return p


# ------------------------------------------------------------ BERT forward ---
def bert_mlm_forward(params, input_ids, labels=None, cfg=CFG):
    B, S = input_ids.shape
    H = cfg.hidden

    # --- embeddings (gather is glue; LayerNorm runs in a Pallas kernel, no zero DMA) ---
    # TODO(synk): no attention_mask is applied (matches HF forward called with only
    # input_ids); dropout is identity (inference semantics).
    x = (params["word_emb"][input_ids].astype(jnp.float32)
         + params["pos_emb"][:S][None, :, :]
         + params["type_emb"][0][None, None, :])                   # [B, S, H]
    x2 = x.reshape(B * S, H)
    x2 = embedding_layernorm(x2, params["emb_ln_g"], params["emb_ln_b"], cfg.ln_eps)

    hidden_states = [x2.reshape(B, S, H)]
    attentions = []

    # --- encoder: one fused Pallas kernel per layer ---
    for lp in params["layers"]:
        x2, probs = encoder_layer(x2, lp, B, S, cfg)
        hidden_states.append(x2.reshape(B, S, H))
        attentions.append(probs)

    # --- MLM head: one fused Pallas kernel (dense + GELU + LN + tied decoder) ---
    logits = mlm_head(x2, params, cfg).reshape(B, S, cfg.vocab_size)

    loss = None
    if labels is not None:
        # standard HF MLM loss: cross-entropy, ignore_index = -100 (plain-JAX glue)
        logp = jax.nn.log_softmax(logits, axis=-1)
        mask = (labels != -100)
        safe = jnp.where(mask, labels, 0)
        nll = -jnp.take_along_axis(logp, safe[..., None], axis=-1)[..., 0]
        loss = jnp.sum(nll * mask) / jnp.maximum(jnp.sum(mask), 1)

    return MLMOutput(loss=loss,
                     logits=logits,
                     hidden_states=tuple(hidden_states),
                     attentions=tuple(attentions))


# --------------------------------------------------------------- the module ---
class MLMVictim:
    """JAX/Pallas analogue of the PyTorch MLMVictim (forward path only)."""

    def __init__(self, num_classes=2, max_len=512, cfg=CFG, seed=0):
        # TODO(synk): tokenizer / process() / save() have no Pallas equivalent
        # (string processing, checkpoint IO); only the model forward is implemented.
        self.cfg = cfg
        self.max_len = max_len
        self.params = init_params(jax.random.PRNGKey(seed), cfg)

    def forward(self, inputs, labels=None):
        return bert_mlm_forward(self.params, inputs, labels=labels, cfg=self.cfg)

    def __call__(self, inputs, labels=None):
        return self.forward(inputs, labels)

    @property
    def word_embedding(self):
        return self.params["word_emb"]


# ----------------------------------------------------------------------------
if __name__ == "__main__":
    key = jax.random.PRNGKey(0)
    k_ids, k_lbl = jax.random.split(key)
    B, S = 2, 8
    input_ids = jax.random.randint(k_ids, (B, S), 0, CFG.vocab_size, dtype=jnp.int32)

    victim = MLMVictim()

    # forward without labels
    out = victim(input_ids)
    jax.block_until_ready(out.logits)
    jax.block_until_ready(out.hidden_states)
    jax.block_until_ready(out.attentions)

    assert out.logits.shape == (B, S, CFG.vocab_size)
    assert len(out.hidden_states) == CFG.num_layers + 1
    assert out.attentions[0].shape == (B, CFG.num_heads, S, S)

    # forward with labels (MLM loss path; -100 entries are ignored)
    labels = jax.random.randint(k_lbl, (B, S), 0, CFG.vocab_size, dtype=jnp.int32)
    labels = labels.at[:, ::2].set(-100)
    out_l = victim(input_ids, labels)
    jax.block_until_ready(out_l.loss)
    assert out_l.loss.shape == ()

    print("KERNEL_OK")
</pallas_src>

<mosaic_0001>
module attributes {stable_mosaic.version = 11 : i64} {
  func.func @_ln_kernel(%arg0: i32, %arg1: memref<16x32xf32, #tpu.memory_space<vmem>>, %arg2: memref<1x32xf32, #tpu.memory_space<vmem>>, %arg3: memref<1x32xf32, #tpu.memory_space<vmem>>, %arg4: memref<16x32xf32, #tpu.memory_space<vmem>>) attributes {dimension_semantics = [#tpu.dimension_semantics<arbitrary>], iteration_bounds = array<i64: 1>, scalar_prefetch = 0 : i64, scratch_operands = 0 : i64, tpu.core_type = #tpu.core_type<tc>, window_params = [{pipeline_mode = #tpu.pipeline_mode<synchronous>, transform_indices = @transform_0, window_bounds = array<i64: 16, 32>}, {pipeline_mode = #tpu.pipeline_mode<synchronous>, transform_indices = @transform_1, window_bounds = array<i64: 1, 32>}, {pipeline_mode = #tpu.pipeline_mode<synchronous>, transform_indices = @transform_2, window_bounds = array<i64: 1, 32>}, {pipeline_mode = #tpu.pipeline_mode<synchronous>, transform_indices = @transform_3, window_bounds = array<i64: 16, 32>}]} {
    %c0 = arith.constant 0 : index
    %c0_0 = arith.constant 0 : index
    %0 = vector.load %arg1[%c0, %c0_0] : memref<16x32xf32, #tpu.memory_space<vmem>>, vector<16x32xf32>
    %c0_1 = arith.constant 0 : index
    %c0_2 = arith.constant 0 : index
    %1 = vector.load %arg2[%c0_1, %c0_2] : memref<1x32xf32, #tpu.memory_space<vmem>>, vector<1x32xf32>
    %c0_3 = arith.constant 0 : index
    %c0_4 = arith.constant 0 : index
    %2 = vector.load %arg3[%c0_3, %c0_4] : memref<1x32xf32, #tpu.memory_space<vmem>>, vector<1x32xf32>
    %cst = arith.constant dense<0.000000e+00> : vector<16xf32>
    %3 = vector.multi_reduction <add>, %0, %cst [1] : vector<16x32xf32> to vector<16xf32>
    %4 = vector.shape_cast %3 : vector<16xf32> to vector<16x1xf32>
    %cst_5 = arith.constant 3.200000e+01 : f32
    %5 = vector.broadcast %cst_5 : f32 to vector<16x1xf32>
    %6 = arith.divf %4, %5 : vector<16x1xf32>
    %7 = vector.broadcast %6 : vector<16x1xf32> to vector<16x32xf32>
    %8 = arith.subf %0, %7 : vector<16x32xf32>
    %9 = arith.mulf %8, %8 : vector<16x32xf32>
    %cst_6 = arith.constant dense<0.000000e+00> : vector<16xf32>
    %10 = vector.multi_reduction <add>, %9, %cst_6 [1] : vector<16x32xf32> to vector<16xf32>
    %11 = vector.shape_cast %10 : vector<16xf32> to vector<16x1xf32>
    %cst_7 = arith.constant 3.200000e+01 : f32
    %12 = vector.broadcast %cst_7 : f32 to vector<16x1xf32>
    %13 = arith.divf %11, %12 : vector<16x1xf32>
    %cst_8 = arith.constant 9.99999996E-13 : f32
    %14 = vector.broadcast %cst_8 : f32 to vector<16x1xf32>
    %15 = arith.addf %13, %14 : vector<16x1xf32>
    %16 = math.rsqrt %15 : vector<16x1xf32>
    %17 = vector.broadcast %16 : vector<16x1xf32> to vector<16x32xf32>
    %18 = arith.mulf %8, %17 : vector<16x32xf32>
    %19 = vector.broadcast %1 : vector<1x32xf32> to vector<16x32xf32>
    %20 = arith.mulf %18, %19 : vector<16x32xf32>
    %21 = vector.broadcast %2 : vector<1x32xf32> to vector<16x32xf32>
    %22 = arith.addf %20, %21 : vector<16x32xf32>
    %c0_9 = arith.constant 0 : index
    %c0_10 = arith.constant 0 : index
    %23 = vector.load %arg4[%c0_9, %c0_10] : memref<16x32xf32, #tpu.memory_space<vmem>>, vector<16x32xf32>
    tpu.vector_store %arg4[%c0_9, %c0_10], %22 {strides = array<i32>} : memref<16x32xf32, #tpu.memory_space<vmem>>, vector<16x32xf32>,
    return
  }
  func.func @transform_0(%arg0: i32) -> (i32, i32) {
    %c0_i32 = arith.constant 0 : i32
    %c0_i32_0 = arith.constant 0 : i32
    %c0_i32_1 = arith.constant 0 : i32
    return %c0_i32, %c0_i32_0 : i32, i32
  }
  func.func @transform_1(%arg0: i32) -> (i32, i32) {
    %c0_i32 = arith.constant 0 : i32
    %c0_i32_0 = arith.constant 0 : i32
    %c0_i32_1 = arith.constant 0 : i32
    return %c0_i32, %c0_i32_0 : i32, i32
  }
  func.func @transform_2(%arg0: i32) -> (i32, i32) {
    %c0_i32 = arith.constant 0 : i32
    %c0_i32_0 = arith.constant 0 : i32
    %c0_i32_1 = arith.constant 0 : i32
    return %c0_i32, %c0_i32_0 : i32, i32
  }
  func.func @transform_3(%arg0: i32) -> (i32, i32) {
    %c0_i32 = arith.constant 0 : i32
    %c0_i32_0 = arith.constant 0 : i32
    %c0_i32_1 = arith.constant 0 : i32
    return %c0_i32, %c0_i32_0 : i32, i32
  }
}

</mosaic_0001>

<llo_original>
// kernel: tpu_custom_call.1
$region0: #{tpu_custom_call.1}
  #allocation0 [shape = 'u32[]', space=smem, size = 0x4, offset = 0x4, fixed_abs, tag = 'smem constant byte address 0x4 - core index']
  #allocation1 [shape = 'u32[144,128]{1,0:T(1,128)}', space=vmem, size = 0x12000, scoped, tag = 'internal scratch']
  %s0 = inlined_call_operand.hbm [shape: f32[16,32], index: 0, kind: input, shape index: {}]
  %s1 = inlined_call_operand.vmem [shape: f32[1,32], index: 1, kind: input, shape index: {}]
  %s2 = inlined_call_operand.vmem [shape: f32[1,32], index: 2, kind: input, shape index: {}]
  %s3 = inlined_call_operand.hbm [shape: f32[16,32], index: 3, kind: output, shape index: {}]
  %s4 = sld [smem:[#allocation0]]
  $region26: #{tpu_custom_call.1} parent=0
    _
  %s6 = ssub.s32 1, %s4
  %s7 = scalar_select 0, %s6, %s4
  $region1: #{tpu_custom_call.1} parent=0
    #allocation2 [shape = 'u8[8192]{0}', space=vmem, size = 0x2000, scoped, tag = 'input window, operand 0, single buffered']
    #allocation3 [shape = 's32[1]{0}', space=sflag, size = 0x4, scoped, tag = 'scoped memory for tpu_custom_call.1']
    #allocation4 [shape = 's32[1]{0}', space=sflag, size = 0x4, scoped, tag = 'scoped memory for tpu_custom_call.1']
    #allocation5 [shape = 'u8[8192]{0}', space=vmem, size = 0x2000, scoped, tag = 'output window, operand 0, single buffered']
    %8 = vsyncpa [#allocation3], 0
    %9 = vsyncpa [#allocation4], 0
    // Predicated region
    $region2: #{tpu_custom_call.1} parent=1 // pred_check
      _
    $region3: #{tpu_custom_call.1} parent=1 // pred_check_branch
      %11 = sbr.rel (0) target = $region5
    $region4: #{tpu_custom_call.1} parent=1 // pred_region
      %s13 = ssub.s32 256, 256
      %14 = vsyncadd [#allocation3], %s13
      %s15 = sshll.u32 [#allocation2], 4
      %s16 = int_to_ptr.vmem [resolvable:$true] %s15
      %21 = dma.hbm_to_vmem [thread:$0]  %s0, 256, %s16, [#allocation3], 128, 128, 8
    $region5: #{tpu_custom_call.1} parent=1 // pred_fallthru
      _
    // Predicated region
    $region6: #{tpu_custom_call.1} parent=1 // pred_check
      _
    $region7: #{tpu_custom_call.1} parent=1 // pred_check_branch
      %23 = sbr.rel (0) target = $region9
    $region8: #{tpu_custom_call.1} parent=1 // pred_region
      _
    $region9: #{tpu_custom_call.1} parent=1 // pred_fallthru
      _
    // Predicated region
    $region10: #{tpu_custom_call.1} parent=1 // pred_check
      _
    $region11: #{tpu_custom_call.1} parent=1 // pred_check_branch
      %25 = sbr.rel (0) target = $region13
    $region12: #{tpu_custom_call.1} parent=1 // pred_region
      _
    $region13: #{tpu_custom_call.1} parent=1 // pred_fallthru
      _
    // Predicated region
    $region14: #{tpu_custom_call.1} parent=1 // pred_check
      _
    $region15: #{tpu_custom_call.1} parent=1 // pred_check_branch
      %27 = sbr.rel (0) target = $region17
    $region16: #{tpu_custom_call.1} parent=1 // pred_region
      %28 = dma.done [#allocation3], 256
    $region17: #{tpu_custom_call.1} parent=1 // pred_fallthru
      _
    %v29 = vld [vmem:[#allocation2] sm:$0xff]
    %v30 = vld [vmem:[#allocation2 + $0x8] sm:$0xff]
    %v31 = vld [vmem:[%s1] sm:$0x1]
    %v32 = vld [vmem:[%s2] sm:$0x1]
    %vm33 = vcmask 261120
    %v34 = vsel %vm33, %v29, 0.0
    %35 = vadd.xlane.f32.xlu0 %v34
    %v36 = vpop.xlane.xlu0 %35
    %v37 = vsel %vm33, %v30, 0.0
    %38 = vadd.xlane.f32.xlu0 %v37
    %v39 = vpop.xlane.xlu0 %38
    %v40 = vrcp.pop 32.0
    %v41 = vmul.f32 %v36, %v40
    %v42 = vmul.f32 %v39, %v40
    %v43 = vsub.f32 %v29, %v41
    %v44 = vsub.f32 %v30, %v42
    %v45 = vmul.f32 %v43, %v43
    %v46 = vmul.f32 %v44, %v44
    %v47 = vsel %vm33, %v45, 0.0
    %48 = vadd.xlane.f32.xlu0 %v47
    %v49 = vpop.xlane.xlu0 %48
    %v50 = vsel %vm33, %v46, 0.0
    %51 = vadd.xlane.f32.xlu0 %v50
    %v52 = vpop.xlane.xlu0 %51
    %v53 = vmul.f32 %v49, %v40
    %v54 = vmul.f32 %v52, %v40
    %v55 = vadd.f32 %v53, 1e-12
    %v56 = vadd.f32 %v54, 1e-12
    %v57 = vrsqrt.pop %v55
    %v58 = vrsqrt.pop %v56
    %v59 = vmul.f32 %v43, %v57
    %v60 = vmul.f32 %v44, %v58
    %v62 = vlaneseq
    %v63 = vshrl.u32 %v62, 7
    %v64 = vsub.s32 0, %v63
    %v65 = vrot.slane %v31, %v64
    %v67 = vmul.f32 %v59, %v65
    %v68 = vmul.f32 %v60, %v65
    %v70 = vlaneseq
    %v71 = vshrl.u32 %v70, 7
    %v72 = vsub.s32 0, %v71
    %v73 = vrot.slane %v32, %v72
    %v75 = vadd.f32 %v67, %v73
    %v76 = vadd.f32 %v68, %v73
    %77 = vst.msk [vmem:[#allocation5] sm:$0xff] %vm33, %v75
    %78 = vst.msk [vmem:[#allocation5 + $0x8] sm:$0xff] %vm33, %v76
    // Predicated region
    $region18: #{tpu_custom_call.1} parent=1 // pred_check
      _
    $region19: #{tpu_custom_call.1} parent=1 // pred_check_branch
      %80 = sbr.rel (0) target = $region21
    $region20: #{tpu_custom_call.1} parent=1 // pred_region
      %s82 = ssub.s32 256, 256
      %83 = vsyncadd [#allocation4], %s82
      %s84 = sshll.u32 [#allocation5], 4
      %s85 = int_to_ptr.vmem [resolvable:$true] %s84
      %90 = dma.vmem_to_hbm [thread:$0]  %s85, 256, %s3, [#allocation4], 128, 128, 8
    $region21: #{tpu_custom_call.1} parent=1 // pred_fallthru
      _
    // Predicated region
    $region22: #{tpu_custom_call.1} parent=1 // pred_check
      _
    $region23: #{tpu_custom_call.1} parent=1 // pred_check_branch
      %92 = sbr.rel (0) target = $region25
    $region24: #{tpu_custom_call.1} parent=1 // pred_region
      %93 = dma.done [#allocation4], 256
    $region25: #{tpu_custom_call.1} parent=1 // pred_fallthru
      _
    %94 = vsyncpa [#allocation3], 1
    %95 = vsyncpa [#allocation4], 1

</llo_original>
